<compile_context>
chip_gen: v5e
topology: v5e:2x2
jax: 0.10.0
libtpu: 0.0.40
codegen_flags: <defaults>
</compile_context>

<pallas_src>
import math

import jax
import jax.numpy as jnp
from jax.experimental import pallas as pl
from jax.experimental.pallas import tpu as pltpu


_PARALLEL = pltpu.CompilerParams(dimension_semantics=("parallel",))


# ---------------------------------------------------------------------------
# Pallas kernels: fused conv(as GEMM) + folded BN + ReLU (+ residual), max-pool.
# Layout: channels-first, spatial H*W in lanes, one batch element per grid step.
# ---------------------------------------------------------------------------
def _conv_bn_relu_kernel(x_ref, w_ref, b_ref, o_ref):
    # out = relu(W @ x + b)      W:[Cout,K] bf16, x:[K,N] -> [Cout,N], f32 acc
    x = x_ref[0].astype(jnp.bfloat16)
    y = jnp.dot(w_ref[...], x, preferred_element_type=jnp.float32)
    y = y + b_ref[...]
    o_ref[0] = jnp.maximum(y, 0.0).astype(o_ref.dtype)


def _conv_bn_kernel(x_ref, w_ref, b_ref, o_ref):
    # out = W @ x + b            (bottleneck downsample branch: folded BN, no ReLU)
    x = x_ref[0].astype(jnp.bfloat16)
    y = jnp.dot(w_ref[...], x, preferred_element_type=jnp.float32)
    o_ref[0] = (y + b_ref[...]).astype(o_ref.dtype)


def _conv_bn_add_relu_kernel(x_ref, res_ref, w_ref, b_ref, o_ref):
    # out = relu(W @ x + b + residual)   (last conv of a bottleneck, skip-add fused)
    x = x_ref[0].astype(jnp.bfloat16)
    y = jnp.dot(w_ref[...], x, preferred_element_type=jnp.float32)
    y = y + b_ref[...] + res_ref[0].astype(jnp.float32)
    o_ref[0] = jnp.maximum(y, 0.0).astype(o_ref.dtype)


def _maxpool9_kernel(p_ref, o_ref):
    # 3x3/s2 max-pool over 9 pre-gathered taps: p:[1,9,C,N] -> out:[1,C,N]
    m = p_ref[0, 0].astype(jnp.float32)
    for t in range(1, 9):                       # static unroll, pure VPU maxes
        m = jnp.maximum(m, p_ref[0, t].astype(jnp.float32))
    o_ref[0] = m.astype(o_ref.dtype)


# ---------------------------------------------------------------------------
# Wrapper glue (XLA ops): patch gathering for k>1 / stride>1 windows.
# Ordering of the folded contraction axis is (Cin, kh, kw), matching
# W[Cout, Cin, kh, kw].reshape(Cout, Cin*kh*kw).
# ---------------------------------------------------------------------------
def _extract_patches(x, ksize, stride, pad, for_pool=False):
    B, C, H, W = x.shape
    if pad:
        x = jnp.pad(x, ((0, 0), (0, 0), (pad, pad), (pad, pad)))
    OH = (H + 2 * pad - ksize) // stride + 1
    OW = (W + 2 * pad - ksize) // stride + 1
    taps = []
    for kh in range(ksize):
        for kw in range(ksize):
            taps.append(x[:, :, kh:kh + stride * OH:stride, kw:kw + stride * OW:stride])
    if for_pool:   # [B, k*k, C, OH*OW]   (taps leading -> cheap VPU max in-kernel)
        p = jnp.stack(taps, axis=1).reshape(B, ksize * ksize, C, OH * OW)
    else:          # [B, C*k*k, OH*OW]    (taps folded into the GEMM contraction)
        p = jnp.stack(taps, axis=2).reshape(B, C * ksize * ksize, OH * OW)
    return p, OH, OW


def conv_bn(x, w2d, bias, *, ksize, stride, pad, relu=True, residual=None):
    """Fused conv (implicit GEMM) + folded eval-mode BN + optional skip-add + ReLU.

    x:        [B, Cin, H, W]  NCHW (f32 for the stem, bf16 afterwards)
    w2d:      [Cout, Cin*k*k] bf16  (BN scale already folded in)
    bias:     [Cout, 1]       f32   (folded BN shift)
    residual: [B, Cout, OH, OW] bf16 or None
    returns   [B, Cout, OH, OW] bf16 (channels-first, lane-dense H*W)
    """
    B, Cin, H, W = x.shape
    Cout = w2d.shape[0]
    if ksize == 1 and stride == 1 and pad == 0:
        xg, OH, OW = x.reshape(B, Cin, H * W), H, W          # free reshape, no im2col
    else:
        xg, OH, OW = _extract_patches(x, ksize, stride, pad)
    K, N = xg.shape[1], OH * OW

    x_spec = pl.BlockSpec((1, K, N), lambda i: (i, 0, 0))
    w_spec = pl.BlockSpec((Cout, K), lambda i: (0, 0))
    b_spec = pl.BlockSpec((Cout, 1), lambda i: (0, 0))
    o_spec = pl.BlockSpec((1, Cout, N), lambda i: (i, 0, 0))
    out_shape = jax.ShapeDtypeStruct((B, Cout, N), jnp.bfloat16)

    if residual is not None:
        r_spec = pl.BlockSpec((1, Cout, N), lambda i: (i, 0, 0))
        out = pl.pallas_call(
            _conv_bn_add_relu_kernel, out_shape=out_shape, grid=(B,),
            in_specs=[x_spec, r_spec, w_spec, b_spec], out_specs=o_spec,
            compiler_params=_PARALLEL,
        )(xg, residual.reshape(B, Cout, N), w2d, bias)
    else:
        kern = _conv_bn_relu_kernel if relu else _conv_bn_kernel
        out = pl.pallas_call(
            kern, out_shape=out_shape, grid=(B,),
            in_specs=[x_spec, w_spec, b_spec], out_specs=o_spec,
            compiler_params=_PARALLEL,
        )(xg, w2d, bias)
    return out.reshape(B, Cout, OH, OW)


def maxpool3x3s2(x):
    """3x3 stride-2 pad-1 max pool. Zero padding == -inf padding here because the
    pool input is post-ReLU (>= 0)."""
    B, C, H, W = x.shape
    p, OH, OW = _extract_patches(x, 3, 2, 1, for_pool=True)
    N = OH * OW
    out = pl.pallas_call(
        _maxpool9_kernel,
        out_shape=jax.ShapeDtypeStruct((B, C, N), jnp.bfloat16),
        grid=(B,),
        in_specs=[pl.BlockSpec((1, 9, C, N), lambda i: (i, 0, 0, 0))],
        out_specs=pl.BlockSpec((1, C, N), lambda i: (i, 0, 0)),
        compiler_params=_PARALLEL,
    )(p)
    return out.reshape(B, C, OH, OW)


# ---------------------------------------------------------------------------
# ResNet50 parameters: random He-init conv weights + synthetic frozen-BN stats,
# folded at init into bf16 [Cout, Cin*k*k] weights and f32 [Cout, 1] biases
# (freeze_bn=True -> BN always runs in eval mode for the forward pass).
# ---------------------------------------------------------------------------
def _fold_conv_bn(key, cin, cout, ksize):
    kw_, kg, kb, km, kv = jax.random.split(key, 5)
    fan_in = cin * ksize * ksize
    w = jax.random.normal(kw_, (cout, cin, ksize, ksize), jnp.float32) / math.sqrt(fan_in)
    gamma = 1.0 + 0.1 * jax.random.normal(kg, (cout,), jnp.float32)
    beta = 0.1 * jax.random.normal(kb, (cout,), jnp.float32)
    mean = 0.1 * jax.random.normal(km, (cout,), jnp.float32)
    var = 1.0 + 0.1 * jax.random.uniform(kv, (cout,), jnp.float32)
    scale = gamma / jnp.sqrt(var + 1e-5)
    w2d = (w * scale[:, None, None, None]).reshape(cout, fan_in).astype(jnp.bfloat16)
    bias = (beta - mean * scale)[:, None].astype(jnp.float32)
    return {"w": w2d, "b": bias}


def init_resnet50_params(key):
    keys = iter(jax.random.split(key, 64))
    params = {"conv1": _fold_conv_bn(next(keys), 3, 64, 7), "layers": []}
    inplanes = 64
    for planes, blocks, stride in ((64, 3, 1), (128, 4, 2), (256, 6, 2), (512, 3, 2)):
        layer = []
        for b in range(blocks):
            s = stride if b == 0 else 1
            blk = {
                "conv1": _fold_conv_bn(next(keys), inplanes, planes, 1),
                "conv2": _fold_conv_bn(next(keys), planes, planes, 3),
                "conv3": _fold_conv_bn(next(keys), planes, planes * 4, 1),
                "stride": s,
                "downsample": (_fold_conv_bn(next(keys), inplanes, planes * 4, 1)
                               if (s != 1 or inplanes != planes * 4) else None),
            }
            layer.append(blk)
            inplanes = planes * 4
        params["layers"].append(layer)
    return params


# ---------------------------------------------------------------------------
# Forward pass (matches ResNet50.forward: returns the feature pyramid dict).
# ---------------------------------------------------------------------------
def bottleneck_forward(x, blk):
    s = blk["stride"]
    if blk["downsample"] is not None:
        identity = conv_bn(x, blk["downsample"]["w"], blk["downsample"]["b"],
                           ksize=1, stride=s, pad=0, relu=False)
    else:
        identity = x
    h = conv_bn(x, blk["conv1"]["w"], blk["conv1"]["b"], ksize=1, stride=1, pad=0)
    h = conv_bn(h, blk["conv2"]["w"], blk["conv2"]["b"], ksize=3, stride=s, pad=1)
    return conv_bn(h, blk["conv3"]["w"], blk["conv3"]["b"], ksize=1, stride=1, pad=0,
                   residual=identity)


def resnet50_forward(params, x):
    feats = {1: x}
    h = conv_bn(x, params["conv1"]["w"], params["conv1"]["b"], ksize=7, stride=2, pad=3)
    feats[2] = h                       # after conv1 + bn1 + relu
    h = maxpool3x3s2(h)
    for i, layer in enumerate(params["layers"]):
        for blk in layer:
            h = bottleneck_forward(h, blk)
        feats[2 ** (i + 2)] = h        # layer1 -> 4, layer2 -> 8, layer3 -> 16, layer4 -> 32
    return feats


# ---------------------------------------------------------------------------
if __name__ == "__main__":
    B, C, H, W = 2, 3, 64, 64
    key = jax.random.PRNGKey(0)
    kx, kp = jax.random.split(key)
    x = jax.random.normal(kx, (B, C, H, W), jnp.float32)
    params = init_resnet50_params(kp)

    feats = resnet50_forward(params, x)
    for v in feats.values():
        jax.block_until_ready(v)

    expected = {1: (B, 3, 64, 64), 2: (B, 64, 32, 32), 4: (B, 256, 16, 16),
                8: (B, 512, 8, 8), 16: (B, 1024, 4, 4), 32: (B, 2048, 2, 2)}
    for k, shp in expected.items():
        assert feats[k].shape == shp, (k, feats[k].shape, shp)
        assert bool(jnp.all(jnp.isfinite(feats[k].astype(jnp.float32))))
    for k in (2, 4, 8, 16, 32):        # every pyramid level is post-ReLU
        assert bool(jnp.all(feats[k].astype(jnp.float32) >= 0.0))
    print("KERNEL_OK")
</pallas_src>

<mosaic_0001>
module attributes {stable_mosaic.version = 11 : i64} {
  func.func @_conv_bn_relu_kernel(%arg0: i32, %arg1: memref<1x147x1024xf32, #tpu.memory_space<vmem>>, %arg2: memref<64x147xbf16, #tpu.memory_space<vmem>>, %arg3: memref<64x1xf32, #tpu.memory_space<vmem>>, %arg4: memref<1x64x1024xbf16, #tpu.memory_space<vmem>>) attributes {dimension_semantics = [#tpu.dimension_semantics<parallel>], iteration_bounds = array<i64: 2>, scalar_prefetch = 0 : i64, scratch_operands = 0 : i64, tpu.core_type = #tpu.core_type<tc>, window_params = [{transform_indices = @transform_0, window_bounds = array<i64: 1, 147, 1024>}, {pipeline_mode = #tpu.pipeline_mode<synchronous>, transform_indices = @transform_1, window_bounds = array<i64: 64, 147>}, {pipeline_mode = #tpu.pipeline_mode<synchronous>, transform_indices = @transform_2, window_bounds = array<i64: 64, 1>}, {transform_indices = @transform_3, window_bounds = array<i64: 1, 64, 1024>}]} {
    %c0 = arith.constant 0 : index
    %c0_0 = arith.constant 0 : index
    %c0_1 = arith.constant 0 : index
    %0 = vector.load %arg1[%c0, %c0_0, %c0_1] : memref<1x147x1024xf32, #tpu.memory_space<vmem>>, vector<1x147x1024xf32>
    %1 = vector.shape_cast %0 : vector<1x147x1024xf32> to vector<147x1024xf32>
    %2 = arith.truncf %1 : vector<147x1024xf32> to vector<147x1024xbf16>
    %c0_2 = arith.constant 0 : index
    %c0_3 = arith.constant 0 : index
    %3 = vector.load %arg2[%c0_2, %c0_3] : memref<64x147xbf16, #tpu.memory_space<vmem>>, vector<64x147xbf16>
    %cst = arith.constant dense<0.000000e+00> : vector<64x1024xf32>
    %4 = tpu.matmul %3, %2, %cst {dimension_numbers = #tpu.dot_dimension_numbers<[1], [0], [0], [1], [0, 0, 1, 1], [], []>} : vector<64x147xbf16>, vector<147x1024xbf16>, vector<64x1024xf32> -> vector<64x1024xf32>
    %c0_4 = arith.constant 0 : index
    %c0_5 = arith.constant 0 : index
    %5 = vector.load %arg3[%c0_4, %c0_5] : memref<64x1xf32, #tpu.memory_space<vmem>>, vector<64x1xf32>
    %6 = vector.broadcast %5 : vector<64x1xf32> to vector<64x1024xf32>
    %7 = arith.addf %4, %6 : vector<64x1024xf32>
    %cst_6 = arith.constant 0.000000e+00 : f32
    %8 = vector.broadcast %cst_6 : f32 to vector<64x1024xf32>
    %9 = arith.maximumf %7, %8 : vector<64x1024xf32>
    %10 = arith.truncf %9 : vector<64x1024xf32> to vector<64x1024xbf16>
    %c0_7 = arith.constant 0 : index
    %c0_8 = arith.constant 0 : index
    %c0_9 = arith.constant 0 : index
    %11 = vector.load %arg4[%c0_7, %c0_8, %c0_9] : memref<1x64x1024xbf16, #tpu.memory_space<vmem>>, vector<1x64x1024xbf16>
    %12 = vector.shape_cast %11 : vector<1x64x1024xbf16> to vector<64x1024xbf16>
    %13 = vector.shape_cast %10 : vector<64x1024xbf16> to vector<1x64x1024xbf16>
    tpu.vector_store %arg4[%c0_7, %c0_8, %c0_9], %13 {strides = array<i32>} : memref<1x64x1024xbf16, #tpu.memory_space<vmem>>, vector<1x64x1024xbf16>,
    return
  }
  func.func @transform_0(%arg0: i32) -> (i32, i32, i32) {
    %c0_i32 = arith.constant 0 : i32
    %c0_i32_0 = arith.constant 0 : i32
    %c0_i32_1 = arith.constant 0 : i32
    return %arg0, %c0_i32, %c0_i32_0 : i32, i32, i32
  }
  func.func @transform_1(%arg0: i32) -> (i32, i32) {
    %c0_i32 = arith.constant 0 : i32
    %c0_i32_0 = arith.constant 0 : i32
    %c0_i32_1 = arith.constant 0 : i32
    return %c0_i32, %c0_i32_0 : i32, i32
  }
  func.func @transform_2(%arg0: i32) -> (i32, i32) {
    %c0_i32 = arith.constant 0 : i32
    %c0_i32_0 = arith.constant 0 : i32
    %c0_i32_1 = arith.constant 0 : i32
    return %c0_i32, %c0_i32_0 : i32, i32
  }
  func.func @transform_3(%arg0: i32) -> (i32, i32, i32) {
    %c0_i32 = arith.constant 0 : i32
    %c0_i32_0 = arith.constant 0 : i32
    %c0_i32_1 = arith.constant 0 : i32
    return %arg0, %c0_i32, %c0_i32_0 : i32, i32, i32
  }
}

</mosaic_0001>

<llo_original>
// kernel: tpu_custom_call.1
$region0: #{tpu_custom_call.1}
  #allocation0 [shape = 'u32[]', space=smem, size = 0x4, offset = 0x4, fixed_abs, tag = 'smem constant byte address 0x4 - core index']
  #allocation1 [shape = 'u32[72,128]{1,0:T(1,128)}', space=vmem, size = 0x9000, scoped, tag = 'internal scratch']
  %s0 = inlined_call_operand.vmem [shape: f32[2,147,1024], index: 0, kind: input, shape index: {}]
  %s1 = inlined_call_operand.vmem [shape: bf16[64,147], index: 1, kind: input, shape index: {}]
  %s2 = inlined_call_operand.vmem [shape: f32[64,1], index: 2, kind: input, shape index: {}]
  %s3 = inlined_call_operand.hbm [shape: bf16[2,64,1024], index: 3, kind: output, shape index: {}]
  %s4 = sld [smem:[#allocation0]]
  $region45: #{tpu_custom_call.1} parent=0
    _
  %s6 = ssub.s32 1, %s4
  %s7 = scalar_select 0, %s6, %s4
  $region1: #{tpu_custom_call.1} parent=0
    #allocation2 [shape = 'u8[262144]{0}', space=vmem, size = 0x40000, scoped, tag = 'output window, operand 0']
    #allocation3 [shape = 's32[2]{0}', space=sflag, size = 0x8, scoped, tag = 'scoped memory for tpu_custom_call.1']
    %8 = vsyncpa [#allocation3], 0
    %s9 = scalar_lea.sflag [#allocation3], 1
    %10 = vsyncpa %s9, 0
    loop: start=0, step=1, limit=4
    $region2: #{tpu_custom_call.1} parent=1 // loop_pre_header
      _
    $region3: #{tpu_custom_call.1} parent=1 // loop_header
      %s12 = sphi 0, %s16
      %p13 = scmp.ge.s32.totalorder %s12, 4
      %s22 = sphi 0, %s24
      %s25 = sphi 0, %s22
      %s26 = sphi 0, %s25
      %s42 = sphi 0, %s26
      %s46 = sphi 0, %s46
      %s48 = sphi 0, %s46
      %s49 = sphi 0, %s48
      %s63 = sphi 0, %s49
      %s67 = sphi 0, %s67
      %s69 = sphi 0, %s67
      %s70 = sphi 0, %s69
      %s84 = sphi 0, %s70
      %s90 = sphi 0, %s92
      %s93 = sphi 0, %s90
      %s94 = sphi 0, %s93
      %s110 = sphi 0, %s94
    $region4: #{tpu_custom_call.1} parent=1 // loop_header_branch
      %15 = sbr.rel (%p13) target = $region8
    $region5: #{tpu_custom_call.1} parent=1 // loop_body
      %s17 = ssub.s32 %s12, 1
      %s18 = ssub.s32 %s12, 2
      %s19 = sadd.s32 %s12, 1
      %s20 = ssub.s32 %s12, %s19
      %p21 = scmp.eq.s32.totalorder %s20, 0
      %s23 = sadd.s32 %s22, 1
      %s24 = scalar_select %p21, %s22, %s23
      %p27 = pneg %p21
      %p28 = scmp.eq.s32.totalorder %s12, 1
      %p29 = por %p27, %p28
      %p30 = scmp.ne.s32.totalorder %s22, %s25
      %p31 = scmp.eq.s32.totalorder %s12, 0
      %p32 = por %p30, %p31
      %p33 = scmp.ne.s32.totalorder %s22, %s25
      %p34 = scmp.eq.s32.totalorder %s17, 1
      %p35 = por %p33, %p34
      %p36 = scmp.ne.s32.totalorder %s25, %s26
      %p37 = scmp.eq.s32.totalorder %s17, 0
      %p38 = por %p36, %p37
      %p39 = scmp.ne.s32.totalorder %s25, %s26
      %p40 = scmp.eq.s32.totalorder %s18, 1
      %p41 = por %p39, %p40
      %p43 = scmp.ne.s32.totalorder %s26, %s42
      %p44 = scmp.eq.s32.totalorder %s18, 0
      %p45 = por %p43, %p44
      %s47 = sadd.s32 %s46, 1
      %p50 = scmp.eq.s32.totalorder %s12, 1
      %p51 = scmp.ne.s32.totalorder %s46, %s48
      %p52 = scmp.eq.s32.totalorder %s12, 0
      %p53 = por %p51, %p52
      %p54 = scmp.ne.s32.totalorder %s46, %s48
      %p55 = scmp.eq.s32.totalorder %s17, 1
      %p56 = por %p54, %p55
      %p57 = scmp.ne.s32.totalorder %s48, %s49
      %p58 = scmp.eq.s32.totalorder %s17, 0
      %p59 = por %p57, %p58
      %p60 = scmp.ne.s32.totalorder %s48, %s49
      %p61 = scmp.eq.s32.totalorder %s18, 1
      %p62 = por %p60, %p61
      %p64 = scmp.ne.s32.totalorder %s49, %s63
      %p65 = scmp.eq.s32.totalorder %s18, 0
      %p66 = por %p64, %p65
      %s68 = sadd.s32 %s67, 1
      %p71 = scmp.eq.s32.totalorder %s12, 1
      %p72 = scmp.ne.s32.totalorder %s67, %s69
      %p73 = scmp.eq.s32.totalorder %s12, 0
      %p74 = por %p72, %p73
      %p75 = scmp.ne.s32.totalorder %s67, %s69
      %p76 = scmp.eq.s32.totalorder %s17, 1
      %p77 = por %p75, %p76
      %p78 = scmp.ne.s32.totalorder %s69, %s70
      %p79 = scmp.eq.s32.totalorder %s17, 0
      %p80 = por %p78, %p79
      %p81 = scmp.ne.s32.totalorder %s69, %s70
      %p82 = scmp.eq.s32.totalorder %s18, 1
      %p83 = por %p81, %p82
      %p85 = scmp.ne.s32.totalorder %s70, %s84
      %p86 = scmp.eq.s32.totalorder %s18, 0
      %p87 = por %p85, %p86
      %s88 = ssub.s32 %s12, %s19
      %p89 = scmp.eq.s32.totalorder %s88, 0
      %s91 = sadd.s32 %s90, 1
      %s92 = scalar_select %p89, %s90, %s91
      %p95 = pneg %p89
      %p96 = scmp.eq.s32.totalorder %s12, 1
      %p97 = por %p95, %p96
      %p98 = scmp.ne.s32.totalorder %s90, %s93
      %p99 = scmp.eq.s32.totalorder %s12, 0
      %p100 = por %p98, %p99
      %p101 = scmp.ne.s32.totalorder %s90, %s93
      %p102 = scmp.eq.s32.totalorder %s17, 1
      %p103 = por %p101, %p102
      %p104 = scmp.ne.s32.totalorder %s93, %s94
      %p105 = scmp.eq.s32.totalorder %s17, 0
      %p106 = por %p104, %p105
      %p107 = scmp.ne.s32.totalorder %s93, %s94
      %p108 = scmp.eq.s32.totalorder %s18, 1
      %p109 = por %p107, %p108
      %p111 = scmp.ne.s32.totalorder %s94, %s110
      %p112 = scmp.eq.s32.totalorder %s18, 0
      %p113 = por %p111, %p112
      %p114 = scmp.le.s32.totalorder 1, %s12
      %p115 = scmp.lt.s32.totalorder %s12, 3
      %p116 = pnand %p114, %p115
      %p117 = pneg %p116
      // Predicated region
      $region9: #{tpu_custom_call.1} parent=5 // pred_check
        _
      $region10: #{tpu_custom_call.1} parent=5 // pred_check_branch
        %119 = sbr.rel (%p116) target = $region12
      $region11: #{tpu_custom_call.1} parent=5 // pred_region
        %s120 = ssub.s32 %s12, 1
        // Predicated region
        $region13: #{tpu_custom_call.1} parent=11 // pred_check
          %p121 = pneg %p59
        $region14: #{tpu_custom_call.1} parent=11 // pred_check_branch
          %123 = sbr.rel (%p121) target = $region16
        $region15: #{tpu_custom_call.1} parent=11 // pred_region
          _
        $region16: #{tpu_custom_call.1} parent=11 // pred_fallthru
          _
        // Predicated region
        $region17: #{tpu_custom_call.1} parent=11 // pred_check
          %p124 = pneg %p80
        $region18: #{tpu_custom_call.1} parent=11 // pred_check_branch
          %126 = sbr.rel (%p124) target = $region20
        $region19: #{tpu_custom_call.1} parent=11 // pred_region
          _
        $region20: #{tpu_custom_call.1} parent=11 // pred_fallthru
          _
      $region12: #{tpu_custom_call.1} parent=5 // pred_fallthru
        _
      %p127 = scmp.lt.s32.totalorder %s12, 2
      // Predicated region
      $region21: #{tpu_custom_call.1} parent=5 // pred_check
        %p128 = pneg %p127
      $region22: #{tpu_custom_call.1} parent=5 // pred_check_branch
        %130 = sbr.rel (%p128) target = $region24
      $region23: #{tpu_custom_call.1} parent=5 // pred_region
        // Predicated region
        $region25: #{tpu_custom_call.1} parent=23 // pred_check
          %p131 = pneg %p32
        $region26: #{tpu_custom_call.1} parent=23 // pred_check_branch
          %133 = sbr.rel (%p131) target = $region28
        $region27: #{tpu_custom_call.1} parent=23 // pred_region
          %p134 = scmp.lt.s32.totalorder %s12, 1
          %s135 = scalar_select %p134, %s12, 1
          %s136 = smul.addr %s135, 152
          %s137 = smul.addr %s136, 8
          %s138 = scalar_lea.vmem %s0, %s137
        $region28: #{tpu_custom_call.1} parent=23 // pred_fallthru
          _
      $region24: #{tpu_custom_call.1} parent=5 // pred_fallthru
        _
      %p139 = scmp.le.s32.totalorder 1, %s12
      %p140 = scmp.lt.s32.totalorder %s12, 3
      %p141 = pnand %p139, %p140
      %p142 = pneg %p141
      // Predicated region
      $region29: #{tpu_custom_call.1} parent=5 // pred_check
        _
      $region30: #{tpu_custom_call.1} parent=5 // pred_check_branch
        %144 = sbr.rel (%p141) target = $region32
      $region31: #{tpu_custom_call.1} parent=5 // pred_region
        %s145 = ssub.s32 %s12, 1
        %p146 = scmp.lt.s32.totalorder %s17, 1
        %s147 = scalar_select %p146, %s17, 1
        %s148 = smul.addr %s147, 152
        %s149 = smul.addr %s148, 8
        %s150 = scalar_lea.vmem %s0, %s149
        %p151 = pneg %p38
        %p152 = pneg %p35
        %p153 = pneg %p59
        %p154 = pneg %p56
        %p155 = pneg %p80
        %p156 = pneg %p77
        %p157 = pneg %p106
        %p158 = pneg %p103
        %s159 = sand.u32 %s93, 1
        %s160 = scalar_lea.sflag [#allocation3], %s159
        %s161 = sand.u32 %s93, 1
        %s162 = smul.addr %s161, 256
        %s163 = scalar_lea.vmem [#allocation2], %s162
        %p164 = scmp.lt.s32.totalorder %s17, 1
        %s165 = scalar_select %p164, %s17, 1
        %s166 = smul.addr %s165, 152
        %s167 = smul.addr %s166, 8
        %s168 = scalar_lea.vmem %s0, %s167
        %v170 = vld [vmem:[%s168] sm:$0xff]
        %v171 = vld [vmem:[%s168 + $0x8] sm:$0xff]
        %v172 = vld [vmem:[%s168 + $0x10] sm:$0xff]
        %v173 = vld [vmem:[%s168 + $0x18] sm:$0xff]
        %v174 = vld [vmem:[%s168 + $0x20] sm:$0xff]
        %v175 = vld [vmem:[%s168 + $0x28] sm:$0xff]
        %v176 = vld [vmem:[%s168 + $0x30] sm:$0xff]
        %v177 = vld [vmem:[%s168 + $0x38] sm:$0xff]
        %v178 = vld [vmem:[%s168 + $0x40] sm:$0xff]
        %v179 = vld [vmem:[%s168 + $0x48] sm:$0xff]
        %v180 = vld [vmem:[%s168 + $0x50] sm:$0xff]
        %v181 = vld [vmem:[%s168 + $0x58] sm:$0xff]
        %v182 = vld [vmem:[%s168 + $0x60] sm:$0xff]
        %v183 = vld [vmem:[%s168 + $0x68] sm:$0xff]
        %v184 = vld [vmem:[%s168 + $0x70] sm:$0xff]
        %v185 = vld [vmem:[%s168 + $0x78] sm:$0xff]
        %v186 = vld [vmem:[%s168 + $0x80] sm:$0xff]
        %v187 = vld [vmem:[%s168 + $0x88] sm:$0xff]
        %v188 = vld [vmem:[%s168 + $0x90] sm:$0xff]
        %v189 = vld [vmem:[%s168 + $0x98] sm:$0xff]
        %v190 = vld [vmem:[%s168 + $0xa0] sm:$0xff]
        %v191 = vld [vmem:[%s168 + $0xa8] sm:$0xff]
        %v192 = vld [vmem:[%s168 + $0xb0] sm:$0xff]
        %v193 = vld [vmem:[%s168 + $0xb8] sm:$0xff]
        %v194 = vld [vmem:[%s168 + $0xc0] sm:$0xff]
        %v195 = vld [vmem:[%s168 + $0xc8] sm:$0xff]
        %v196 = vld [vmem:[%s168 + $0xd0] sm:$0xff]
        %v197 = vld [vmem:[%s168 + $0xd8] sm:$0xff]
        %v198 = vld [vmem:[%s168 + $0xe0] sm:$0xff]
        %v199 = vld [vmem:[%s168 + $0xe8] sm:$0xff]
        %v200 = vld [vmem:[%s168 + $0xf0] sm:$0xff]
        %v201 = vld [vmem:[%s168 + $0xf8] sm:$0xff]
        %v202 = vld [vmem:[%s168 + $0x100] sm:$0xff]
        %v203 = vld [vmem:[%s168 + $0x108] sm:$0xff]
        %v204 = vld [vmem:[%s168 + $0x110] sm:$0xff]
        %v205 = vld [vmem:[%s168 + $0x118] sm:$0xff]
        %v206 = vld [vmem:[%s168 + $0x120] sm:$0xff]
        %v207 = vld [vmem:[%s168 + $0x128] sm:$0xff]
        %v208 = vld [vmem:[%s168 + $0x130] sm:$0xff]
        %v209 = vld [vmem:[%s168 + $0x138] sm:$0xff]
        %v210 = vld [vmem:[%s168 + $0x140] sm:$0xff]
        %v211 = vld [vmem:[%s168 + $0x148] sm:$0xff]
        %v212 = vld [vmem:[%s168 + $0x150] sm:$0xff]
        %v213 = vld [vmem:[%s168 + $0x158] sm:$0xff]
        %v214 = vld [vmem:[%s168 + $0x160] sm:$0xff]
        %v215 = vld [vmem:[%s168 + $0x168] sm:$0xff]
        %v216 = vld [vmem:[%s168 + $0x170] sm:$0xff]
        %v217 = vld [vmem:[%s168 + $0x178] sm:$0xff]
        %v218 = vld [vmem:[%s168 + $0x180] sm:$0xff]
        %v219 = vld [vmem:[%s168 + $0x188] sm:$0xff]
        %v220 = vld [vmem:[%s168 + $0x190] sm:$0xff]
        %v221 = vld [vmem:[%s168 + $0x198] sm:$0xff]
        %v222 = vld [vmem:[%s168 + $0x1a0] sm:$0xff]
        %v223 = vld [vmem:[%s168 + $0x1a8] sm:$0xff]
        %v224 = vld [vmem:[%s168 + $0x1b0] sm:$0xff]
        %v225 = vld [vmem:[%s168 + $0x1b8] sm:$0xff]
        %v226 = vld [vmem:[%s168 + $0x1c0] sm:$0xff]
        %v227 = vld [vmem:[%s168 + $0x1c8] sm:$0xff]
        %v228 = vld [vmem:[%s168 + $0x1d0] sm:$0xff]
        %v229 = vld [vmem:[%s168 + $0x1d8] sm:$0xff]
        %v230 = vld [vmem:[%s168 + $0x1e0] sm:$0xff]
        %v231 = vld [vmem:[%s168 + $0x1e8] sm:$0xff]
        %v232 = vld [vmem:[%s168 + $0x1f0] sm:$0xff]
        %v233 = vld [vmem:[%s168 + $0x1f8] sm:$0xff]
        %v234 = vld [vmem:[%s168 + $0x200] sm:$0xff]
        %v235 = vld [vmem:[%s168 + $0x208] sm:$0xff]
        %v236 = vld [vmem:[%s168 + $0x210] sm:$0xff]
        %v237 = vld [vmem:[%s168 + $0x218] sm:$0xff]
        %v238 = vld [vmem:[%s168 + $0x220] sm:$0xff]
        %v239 = vld [vmem:[%s168 + $0x228] sm:$0xff]
        %v240 = vld [vmem:[%s168 + $0x230] sm:$0xff]
        %v241 = vld [vmem:[%s168 + $0x238] sm:$0xff]
        %v242 = vld [vmem:[%s168 + $0x240] sm:$0xff]
        %v243 = vld [vmem:[%s168 + $0x248] sm:$0xff]
        %v244 = vld [vmem:[%s168 + $0x250] sm:$0xff]
        %v245 = vld [vmem:[%s168 + $0x258] sm:$0xff]
        %v246 = vld [vmem:[%s168 + $0x260] sm:$0xff]
        %v247 = vld [vmem:[%s168 + $0x268] sm:$0xff]
        %v248 = vld [vmem:[%s168 + $0x270] sm:$0xff]
        %v249 = vld [vmem:[%s168 + $0x278] sm:$0xff]
        %v250 = vld [vmem:[%s168 + $0x280] sm:$0xff]
        %v251 = vld [vmem:[%s168 + $0x288] sm:$0xff]
        %v252 = vld [vmem:[%s168 + $0x290] sm:$0xff]
        %v253 = vld [vmem:[%s168 + $0x298] sm:$0xff]
        %v254 = vld [vmem:[%s168 + $0x2a0] sm:$0xff]
        %v255 = vld [vmem:[%s168 + $0x2a8] sm:$0xff]
        %v256 = vld [vmem:[%s168 + $0x2b0] sm:$0xff]
        %v257 = vld [vmem:[%s168 + $0x2b8] sm:$0xff]
        %v258 = vld [vmem:[%s168 + $0x2c0] sm:$0xff]
        %v259 = vld [vmem:[%s168 + $0x2c8] sm:$0xff]
        %v260 = vld [vmem:[%s168 + $0x2d0] sm:$0xff]
        %v261 = vld [vmem:[%s168 + $0x2d8] sm:$0xff]
        %v262 = vld [vmem:[%s168 + $0x2e0] sm:$0xff]
        %v263 = vld [vmem:[%s168 + $0x2e8] sm:$0xff]
        %v264 = vld [vmem:[%s168 + $0x2f0] sm:$0xff]
        %v265 = vld [vmem:[%s168 + $0x2f8] sm:$0xff]
        %v266 = vld [vmem:[%s168 + $0x300] sm:$0xff]
        %v267 = vld [vmem:[%s168 + $0x308] sm:$0xff]
        %v268 = vld [vmem:[%s168 + $0x310] sm:$0xff]
        %v269 = vld [vmem:[%s168 + $0x318] sm:$0xff]
        %v270 = vld [vmem:[%s168 + $0x320] sm:$0xff]
        %v271 = vld [vmem:[%s168 + $0x328] sm:$0xff]
        %v272 = vld [vmem:[%s168 + $0x330] sm:$0xff]
        %v273 = vld [vmem:[%s168 + $0x338] sm:$0xff]
        %v274 = vld [vmem:[%s168 + $0x340] sm:$0xff]
        %v275 = vld [vmem:[%s168 + $0x348] sm:$0xff]
        %v276 = vld [vmem:[%s168 + $0x350] sm:$0xff]
        %v277 = vld [vmem:[%s168 + $0x358] sm:$0xff]
        %v278 = vld [vmem:[%s168 + $0x360] sm:$0xff]
        %v279 = vld [vmem:[%s168 + $0x368] sm:$0xff]
        %v280 = vld [vmem:[%s168 + $0x370] sm:$0xff]
        %v281 = vld [vmem:[%s168 + $0x378] sm:$0xff]
        %v282 = vld [vmem:[%s168 + $0x380] sm:$0xff]
        %v283 = vld [vmem:[%s168 + $0x388] sm:$0xff]
        %v284 = vld [vmem:[%s168 + $0x390] sm:$0xff]
        %v285 = vld [vmem:[%s168 + $0x398] sm:$0xff]
        %v286 = vld [vmem:[%s168 + $0x3a0] sm:$0xff]
        %v287 = vld [vmem:[%s168 + $0x3a8] sm:$0xff]
        %v288 = vld [vmem:[%s168 + $0x3b0] sm:$0xff]
        %v289 = vld [vmem:[%s168 + $0x3b8] sm:$0xff]
        %v290 = vld [vmem:[%s168 + $0x3c0] sm:$0xff]
        %v291 = vld [vmem:[%s168 + $0x3c8] sm:$0xff]
        %v292 = vld [vmem:[%s168 + $0x3d0] sm:$0xff]
        %v293 = vld [vmem:[%s168 + $0x3d8] sm:$0xff]
        %v294 = vld [vmem:[%s168 + $0x3e0] sm:$0xff]
        %v295 = vld [vmem:[%s168 + $0x3e8] sm:$0xff]
        %v296 = vld [vmem:[%s168 + $0x3f0] sm:$0xff]
        %v297 = vld [vmem:[%s168 + $0x3f8] sm:$0xff]
        %v298 = vld [vmem:[%s168 + $0x400] sm:$0xff]
        %v299 = vld [vmem:[%s168 + $0x408] sm:$0xff]
        %v300 = vld [vmem:[%s168 + $0x410] sm:$0xff]
        %v301 = vld [vmem:[%s168 + $0x418] sm:$0xff]
        %v302 = vld [vmem:[%s168 + $0x420] sm:$0xff]
        %v303 = vld [vmem:[%s168 + $0x428] sm:$0xff]
        %v304 = vld [vmem:[%s168 + $0x430] sm:$0xff]
        %v305 = vld [vmem:[%s168 + $0x438] sm:$0xff]
        %v306 = vld [vmem:[%s168 + $0x440] sm:$0xff]
        %v307 = vld [vmem:[%s168 + $0x448] sm:$0xff]
        %v308 = vld [vmem:[%s168 + $0x450] sm:$0xff]
        %v309 = vld [vmem:[%s168 + $0x458] sm:$0xff]
        %v310 = vld [vmem:[%s168 + $0x460] sm:$0xff]
        %v311 = vld [vmem:[%s168 + $0x468] sm:$0xff]
        %v312 = vld [vmem:[%s168 + $0x470] sm:$0xff]
        %v313 = vld [vmem:[%s168 + $0x478] sm:$0xff]
        %v314 = vld [vmem:[%s168 + $0x480] sm:$0x7]
        %v315 = vld [vmem:[%s168 + $0x488] sm:$0x7]
        %v316 = vld [vmem:[%s168 + $0x490] sm:$0x7]
        %v317 = vld [vmem:[%s168 + $0x498] sm:$0x7]
        %v318 = vld [vmem:[%s168 + $0x4a0] sm:$0x7]
        %v319 = vld [vmem:[%s168 + $0x4a8] sm:$0x7]
        %v320 = vld [vmem:[%s168 + $0x4b0] sm:$0x7]
        %v321 = vld [vmem:[%s168 + $0x4b8] sm:$0x7]
        %v322 = vpack.c.bf16 %v178, %v170
        %v323 = vpack.c.bf16 %v179, %v171
        %v324 = vpack.c.bf16 %v180, %v172
        %v325 = vpack.c.bf16 %v181, %v173
        %v326 = vpack.c.bf16 %v182, %v174
        %v327 = vpack.c.bf16 %v183, %v175
        %v328 = vpack.c.bf16 %v184, %v176
        %v329 = vpack.c.bf16 %v185, %v177
        %v330 = vpack.c.bf16 %v194, %v186
        %v331 = vpack.c.bf16 %v195, %v187
        %v332 = vpack.c.bf16 %v196, %v188
        %v333 = vpack.c.bf16 %v197, %v189
        %v334 = vpack.c.bf16 %v198, %v190
        %v335 = vpack.c.bf16 %v199, %v191
        %v336 = vpack.c.bf16 %v200, %v192
        %v337 = vpack.c.bf16 %v201, %v193
        %v338 = vpack.c.bf16 %v210, %v202
        %v339 = vpack.c.bf16 %v211, %v203
        %v340 = vpack.c.bf16 %v212, %v204
        %v341 = vpack.c.bf16 %v213, %v205
        %v342 = vpack.c.bf16 %v214, %v206
        %v343 = vpack.c.bf16 %v215, %v207
        %v344 = vpack.c.bf16 %v216, %v208
        %v345 = vpack.c.bf16 %v217, %v209
        %v346 = vpack.c.bf16 %v226, %v218
        %v347 = vpack.c.bf16 %v227, %v219
        %v348 = vpack.c.bf16 %v228, %v220
        %v349 = vpack.c.bf16 %v229, %v221
        %v350 = vpack.c.bf16 %v230, %v222
        %v351 = vpack.c.bf16 %v231, %v223
        %v352 = vpack.c.bf16 %v232, %v224
        %v353 = vpack.c.bf16 %v233, %v225
        %v354 = vpack.c.bf16 %v242, %v234
        %v355 = vpack.c.bf16 %v243, %v235
        %v356 = vpack.c.bf16 %v244, %v236
        %v357 = vpack.c.bf16 %v245, %v237
        %v358 = vpack.c.bf16 %v246, %v238
        %v359 = vpack.c.bf16 %v247, %v239
        %v360 = vpack.c.bf16 %v248, %v240
        %v361 = vpack.c.bf16 %v249, %v241
        %v362 = vpack.c.bf16 %v258, %v250
        %v363 = vpack.c.bf16 %v259, %v251
        %v364 = vpack.c.bf16 %v260, %v252
        %v365 = vpack.c.bf16 %v261, %v253
        %v366 = vpack.c.bf16 %v262, %v254
        %v367 = vpack.c.bf16 %v263, %v255
        %v368 = vpack.c.bf16 %v264, %v256
        %v369 = vpack.c.bf16 %v265, %v257
        %v370 = vpack.c.bf16 %v274, %v266
        %v371 = vpack.c.bf16 %v275, %v267
        %v372 = vpack.c.bf16 %v276, %v268
        %v373 = vpack.c.bf16 %v277, %v269
        %v374 = vpack.c.bf16 %v278, %v270
        %v375 = vpack.c.bf16 %v279, %v271
        %v376 = vpack.c.bf16 %v280, %v272
        %v377 = vpack.c.bf16 %v281, %v273
        %v378 = vpack.c.bf16 %v290, %v282
        %v379 = vpack.c.bf16 %v291, %v283
        %v380 = vpack.c.bf16 %v292, %v284
        %v381 = vpack.c.bf16 %v293, %v285
        %v382 = vpack.c.bf16 %v294, %v286
        %v383 = vpack.c.bf16 %v295, %v287
        %v384 = vpack.c.bf16 %v296, %v288
        %v385 = vpack.c.bf16 %v297, %v289
        %v386 = vpack.c.bf16 %v306, %v298
        %v387 = vpack.c.bf16 %v307, %v299
        %v388 = vpack.c.bf16 %v308, %v300
        %v389 = vpack.c.bf16 %v309, %v301
        %v390 = vpack.c.bf16 %v310, %v302
        %v391 = vpack.c.bf16 %v311, %v303
        %v392 = vpack.c.bf16 %v312, %v304
        %v393 = vpack.c.bf16 %v313, %v305
        %v394 = vpack.c.bf16 %v314, %v314
        %v395 = vpack.c.bf16 %v315, %v315
        %v396 = vpack.c.bf16 %v316, %v316
        %v397 = vpack.c.bf16 %v317, %v317
        %v398 = vpack.c.bf16 %v318, %v318
        %v399 = vpack.c.bf16 %v319, %v319
        %v400 = vpack.c.bf16 %v320, %v320
        %v401 = vpack.c.bf16 %v321, %v321
        %v402 = vld [vmem:[%s1] sm:$0xff]
        %v403 = vld [vmem:[%s1 + $0x8] sm:$0xff]
        %v404 = vld [vmem:[%s1 + $0x10] sm:$0xff]
        %v405 = vld [vmem:[%s1 + $0x18] sm:$0xff]
        %v406 = vld [vmem:[%s1 + $0x20] sm:$0xff]
        %v407 = vld [vmem:[%s1 + $0x28] sm:$0xff]
        %v408 = vld [vmem:[%s1 + $0x30] sm:$0xff]
        %v409 = vld [vmem:[%s1 + $0x38] sm:$0xff]
        %v410 = vld [vmem:[%s2] sm:$0xff]
        %v411 = vld [vmem:[%s2 + $0x8] sm:$0xff]
        %v412 = vld [vmem:[%s2 + $0x10] sm:$0xff]
        %v413 = vld [vmem:[%s2 + $0x18] sm:$0xff]
        %v414 = vld [vmem:[%s2 + $0x20] sm:$0xff]
        %v415 = vld [vmem:[%s2 + $0x28] sm:$0xff]
        %v416 = vld [vmem:[%s2 + $0x30] sm:$0xff]
        %v417 = vld [vmem:[%s2 + $0x38] sm:$0xff]
        %419 = vset.pattern.permute.xlu0 0
        %420 = vperm.xlu0 %419, %v410
        %v421 = vpop.permute.xlu0 %420
        %424 = vset.pattern.permute.xlu0 0
        %425 = vperm.xlu0 %424, %v411
        %v426 = vpop.permute.xlu0 %425
        %429 = vset.pattern.permute.xlu0 0
        %430 = vperm.xlu0 %429, %v412
        %v431 = vpop.permute.xlu0 %430
        %434 = vset.pattern.permute.xlu0 0
        %435 = vperm.xlu0 %434, %v413
        %v436 = vpop.permute.xlu0 %435
        %439 = vset.pattern.permute.xlu0 0
        %440 = vperm.xlu0 %439, %v414
        %v441 = vpop.permute.xlu0 %440
        %444 = vset.pattern.permute.xlu0 0
        %445 = vperm.xlu0 %444, %v415
        %v446 = vpop.permute.xlu0 %445
        %449 = vset.pattern.permute.xlu0 0
        %450 = vperm.xlu0 %449, %v416
        %v451 = vpop.permute.xlu0 %450
        %454 = vset.pattern.permute.xlu0 0
        %455 = vperm.xlu0 %454, %v417
        %v456 = vpop.permute.xlu0 %455
        %v466 = vunpack.c.l.b16 %v402
        %v467 = vunpack.c.h.b16 %v402
        %v468 = vunpack.c.l.b16 %v403
        %v469 = vunpack.c.h.b16 %v403
        %v470 = vunpack.c.l.b16 %v404
        %v471 = vunpack.c.h.b16 %v404
        %v472 = vunpack.c.l.b16 %v405
        %v473 = vunpack.c.h.b16 %v405
        %v474 = vunpack.c.l.b16 %v406
        %v475 = vunpack.c.h.b16 %v406
        %v476 = vunpack.c.l.b16 %v407
        %v477 = vunpack.c.h.b16 %v407
        %v478 = vunpack.c.l.b16 %v408
        %v479 = vunpack.c.h.b16 %v408
        %v480 = vunpack.c.l.b16 %v409
        %v481 = vunpack.c.h.b16 %v409
        %v482 = vpack.c.b16 %v468, %v466
        %v483 = vpack.c.b16 %v469, %v467
        %v484 = vpack.c.b16 %v472, %v470
        %v485 = vpack.c.b16 %v473, %v471
        %v486 = vpack.c.b16 %v476, %v474
        %v487 = vpack.c.b16 %v477, %v475
        %v488 = vpack.c.b16 %v480, %v478
        %v489 = vpack.c.b16 %v481, %v479
        %vm494 = vcmask 154624
        %v496 = vsel %vm494, %v483, 0
        %v499 = vsel %vm494, %v485, 0
        %v502 = vsel %vm494, %v487, 0
        %v505 = vsel %vm494, %v489, 0
        %vm507 = vcmask 1040384
        %vm508 = vcmask 1041408
        %v509 = vsel %vm507, 4294967295, 65535
        %v510 = vsel %vm508, %v509, 0
        %v512 = vand.u32 %v394, %v510
        %v515 = vand.u32 %v395, %v510
        %v518 = vand.u32 %v396, %v510
        %v521 = vand.u32 %v397, %v510
        %v524 = vand.u32 %v398, %v510
        %v527 = vand.u32 %v399, %v510
        %v530 = vand.u32 %v400, %v510
        %v533 = vand.u32 %v401, %v510
        %535 = vmatpush.bf16.msra.mxu0 %v378
        %536 = vmatpush.bf16.msra.mxu0 %v370
        %537 = vmatpush.bf16.msra.mxu0 %v362
        %538 = vmatpush.bf16.msra.mxu0 %v354
        %539 = vmatpush.bf16.msra.mxu0 %v346
        %540 = vmatpush.bf16.msra.mxu0 %v338
        %541 = vmatpush.bf16.msra.mxu0 %v330
        %542 = vmatpush.bf16.msra.mxu0 %v322
        %543 = vmatmul.bf16.gmra.mxu0 %v482
        %v544 = vpop.f32.mrf.mxu0
        %v545 = vadd.f32 %v421, %v544
        %v546 = vpop.f32.mrf.mxu0
        %v547 = vadd.f32 %v426, %v546
        %548 = vmatmul.bf16.gmra.mxu0 %v484
        %v549 = vpop.f32.mrf.mxu0
        %v550 = vadd.f32 %v431, %v549
        %v551 = vpop.f32.mrf.mxu0
        %v552 = vadd.f32 %v436, %v551
        %553 = vmatmul.bf16.gmra.mxu0 %v486
        %v554 = vpop.f32.mrf.mxu0
        %v555 = vadd.f32 %v441, %v554
        %v556 = vpop.f32.mrf.mxu0
        %v557 = vadd.f32 %v446, %v556
        %558 = vmatmul.bf16.gmra.mxu0 %v488
        %v559 = vpop.f32.mrf.mxu0
        %v560 = vadd.f32 %v451, %v559
        %v561 = vpop.f32.mrf.mxu0
        %v562 = vadd.f32 %v456, %v561
        %563 = vdwg.mxu0
        %564 = vmatpush.bf16.msra.mxu0 0
        %565 = vmatpush.bf16.msra.mxu0 0
        %566 = vmatpush.bf16.msra.mxu0 0
        %567 = vmatpush.bf16.msra.mxu0 0
        %568 = vmatpush.bf16.msra.mxu0 0
        %569 = vmatpush.bf16.msra.mxu0 0
        %570 = vmatpush.bf16.msra.mxu0 %v512
        %571 = vmatpush.bf16.msra.mxu0 %v386
        %572 = vmatmul.bf16.gmra.mxu0 %v496
        %v573 = vpop.f32.mrf.mxu0
        %v574 = vadd.f32 %v545, %v573
        %v575 = vpop.f32.mrf.mxu0
        %v576 = vadd.f32 %v547, %v575
        %577 = vmatmul.bf16.gmra.mxu0 %v499
        %v578 = vpop.f32.mrf.mxu0
        %v579 = vadd.f32 %v550, %v578
        %v580 = vpop.f32.mrf.mxu0
        %v581 = vadd.f32 %v552, %v580
        %582 = vmatmul.bf16.gmra.mxu0 %v502
        %v583 = vpop.f32.mrf.mxu0
        %v584 = vadd.f32 %v555, %v583
        %v585 = vpop.f32.mrf.mxu0
        %v586 = vadd.f32 %v557, %v585
        %587 = vmatmul.bf16.gmra.mxu0 %v505
        %v588 = vpop.f32.mrf.mxu0
        %v589 = vadd.f32 %v560, %v588
        %v590 = vpop.f32.mrf.mxu0
        %v591 = vadd.f32 %v562, %v590
        %592 = vdwg.mxu0
        %593 = vmatpush.bf16.msra.mxu0 %v379
        %594 = vmatpush.bf16.msra.mxu0 %v371
        %595 = vmatpush.bf16.msra.mxu0 %v363
        %596 = vmatpush.bf16.msra.mxu0 %v355
        %597 = vmatpush.bf16.msra.mxu0 %v347
        %598 = vmatpush.bf16.msra.mxu0 %v339
        %599 = vmatpush.bf16.msra.mxu0 %v331
        %600 = vmatpush.bf16.msra.mxu0 %v323
        %601 = vmatmul.bf16.gmra.mxu0 %v482
        %v602 = vpop.f32.mrf.mxu0
        %v603 = vadd.f32 %v421, %v602
        %v604 = vpop.f32.mrf.mxu0
        %v605 = vadd.f32 %v426, %v604
        %606 = vmatmul.bf16.gmra.mxu0 %v484
        %v607 = vpop.f32.mrf.mxu0
        %v608 = vadd.f32 %v431, %v607
        %v609 = vpop.f32.mrf.mxu0
        %v610 = vadd.f32 %v436, %v609
        %611 = vmatmul.bf16.gmra.mxu0 %v486
        %v612 = vpop.f32.mrf.mxu0
        %v613 = vadd.f32 %v441, %v612
        %v614 = vpop.f32.mrf.mxu0
        %v615 = vadd.f32 %v446, %v614
        %616 = vmatmul.bf16.gmra.mxu0 %v488
        %v617 = vpop.f32.mrf.mxu0
        %v618 = vadd.f32 %v451, %v617
        %v619 = vpop.f32.mrf.mxu0
        %v620 = vadd.f32 %v456, %v619
        %621 = vdwg.mxu0
        %622 = vmatpush.bf16.msra.mxu0 0
        %623 = vmatpush.bf16.msra.mxu0 0
        %624 = vmatpush.bf16.msra.mxu0 0
        %625 = vmatpush.bf16.msra.mxu0 0
        %626 = vmatpush.bf16.msra.mxu0 0
        %627 = vmatpush.bf16.msra.mxu0 0
        %628 = vmatpush.bf16.msra.mxu0 %v515
        %629 = vmatpush.bf16.msra.mxu0 %v387
        %630 = vmatmul.bf16.gmra.mxu0 %v496
        %v631 = vpop.f32.mrf.mxu0
        %v632 = vadd.f32 %v603, %v631
        %v633 = vpop.f32.mrf.mxu0
        %v634 = vadd.f32 %v605, %v633
        %635 = vmatmul.bf16.gmra.mxu0 %v499
        %v636 = vpop.f32.mrf.mxu0
        %v637 = vadd.f32 %v608, %v636
        %v638 = vpop.f32.mrf.mxu0
        %v639 = vadd.f32 %v610, %v638
        %640 = vmatmul.bf16.gmra.mxu0 %v502
        %v641 = vpop.f32.mrf.mxu0
        %v642 = vadd.f32 %v613, %v641
        %v643 = vpop.f32.mrf.mxu0
        %v644 = vadd.f32 %v615, %v643
        %645 = vmatmul.bf16.gmra.mxu0 %v505
        %v646 = vpop.f32.mrf.mxu0
        %v647 = vadd.f32 %v618, %v646
        %v648 = vpop.f32.mrf.mxu0
        %v649 = vadd.f32 %v620, %v648
        %650 = vdwg.mxu0
        %651 = vmatpush.bf16.msra.mxu0 %v380
        %652 = vmatpush.bf16.msra.mxu0 %v372
        %653 = vmatpush.bf16.msra.mxu0 %v364
        %654 = vmatpush.bf16.msra.mxu0 %v356
        %655 = vmatpush.bf16.msra.mxu0 %v348
        %656 = vmatpush.bf16.msra.mxu0 %v340
        %657 = vmatpush.bf16.msra.mxu0 %v332
        %658 = vmatpush.bf16.msra.mxu0 %v324
        %659 = vmatmul.bf16.gmra.mxu0 %v482
        %v660 = vpop.f32.mrf.mxu0
        %v661 = vadd.f32 %v421, %v660
        %v662 = vpop.f32.mrf.mxu0
        %v663 = vadd.f32 %v426, %v662
        %664 = vmatmul.bf16.gmra.mxu0 %v484
        %v665 = vpop.f32.mrf.mxu0
        %v666 = vadd.f32 %v431, %v665
        %v667 = vpop.f32.mrf.mxu0
        %v668 = vadd.f32 %v436, %v667
        %669 = vmatmul.bf16.gmra.mxu0 %v486
        %v670 = vpop.f32.mrf.mxu0
        %v671 = vadd.f32 %v441, %v670
        %v672 = vpop.f32.mrf.mxu0
        %v673 = vadd.f32 %v446, %v672
        %674 = vmatmul.bf16.gmra.mxu0 %v488
        %v675 = vpop.f32.mrf.mxu0
        %v676 = vadd.f32 %v451, %v675
        %v677 = vpop.f32.mrf.mxu0
        %v678 = vadd.f32 %v456, %v677
        %679 = vdwg.mxu0
        %680 = vmatpush.bf16.msra.mxu0 0
        %681 = vmatpush.bf16.msra.mxu0 0
        %682 = vmatpush.bf16.msra.mxu0 0
        %683 = vmatpush.bf16.msra.mxu0 0
        %684 = vmatpush.bf16.msra.mxu0 0
        %685 = vmatpush.bf16.msra.mxu0 0
        %686 = vmatpush.bf16.msra.mxu0 %v518
        %687 = vmatpush.bf16.msra.mxu0 %v388
        %688 = vmatmul.bf16.gmra.mxu0 %v496
        %v689 = vpop.f32.mrf.mxu0
        %v690 = vadd.f32 %v661, %v689
        %v691 = vpop.f32.mrf.mxu0
        %v692 = vadd.f32 %v663, %v691
        %693 = vmatmul.bf16.gmra.mxu0 %v499
        %v694 = vpop.f32.mrf.mxu0
        %v695 = vadd.f32 %v666, %v694
        %v696 = vpop.f32.mrf.mxu0
        %v697 = vadd.f32 %v668, %v696
        %698 = vmatmul.bf16.gmra.mxu0 %v502
        %v699 = vpop.f32.mrf.mxu0
        %v700 = vadd.f32 %v671, %v699
        %v701 = vpop.f32.mrf.mxu0
        %v702 = vadd.f32 %v673, %v701
        %703 = vmatmul.bf16.gmra.mxu0 %v505
        %v704 = vpop.f32.mrf.mxu0
        %v705 = vadd.f32 %v676, %v704
        %v706 = vpop.f32.mrf.mxu0
        %v707 = vadd.f32 %v678, %v706
        %708 = vdwg.mxu0
        %709 = vmatpush.bf16.msra.mxu0 %v381
        %710 = vmatpush.bf16.msra.mxu0 %v373
        %711 = vmatpush.bf16.msra.mxu0 %v365
        %712 = vmatpush.bf16.msra.mxu0 %v357
        %713 = vmatpush.bf16.msra.mxu0 %v349
        %714 = vmatpush.bf16.msra.mxu0 %v341
        %715 = vmatpush.bf16.msra.mxu0 %v333
        %716 = vmatpush.bf16.msra.mxu0 %v325
        %717 = vmatmul.bf16.gmra.mxu0 %v482
        %v718 = vpop.f32.mrf.mxu0
        %v719 = vadd.f32 %v421, %v718
        %v720 = vpop.f32.mrf.mxu0
        %v721 = vadd.f32 %v426, %v720
        %722 = vmatmul.bf16.gmra.mxu0 %v484
        %v723 = vpop.f32.mrf.mxu0
        %v724 = vadd.f32 %v431, %v723
        %v725 = vpop.f32.mrf.mxu0
        %v726 = vadd.f32 %v436, %v725
        %727 = vmatmul.bf16.gmra.mxu0 %v486
        %v728 = vpop.f32.mrf.mxu0
        %v729 = vadd.f32 %v441, %v728
        %v730 = vpop.f32.mrf.mxu0
        %v731 = vadd.f32 %v446, %v730
        %732 = vmatmul.bf16.gmra.mxu0 %v488
        %v733 = vpop.f32.mrf.mxu0
        %v734 = vadd.f32 %v451, %v733
        %v735 = vpop.f32.mrf.mxu0
        %v736 = vadd.f32 %v456, %v735
        %737 = vdwg.mxu0
        %738 = vmatpush.bf16.msra.mxu0 0
        %739 = vmatpush.bf16.msra.mxu0 0
        %740 = vmatpush.bf16.msra.mxu0 0
        %741 = vmatpush.bf16.msra.mxu0 0
        %742 = vmatpush.bf16.msra.mxu0 0
        %743 = vmatpush.bf16.msra.mxu0 0
        %744 = vmatpush.bf16.msra.mxu0 %v521
        %745 = vmatpush.bf16.msra.mxu0 %v389
        %746 = vmatmul.bf16.gmra.mxu0 %v496
        %v747 = vpop.f32.mrf.mxu0
        %v748 = vadd.f32 %v719, %v747
        %v749 = vpop.f32.mrf.mxu0
        %v750 = vadd.f32 %v721, %v749
        %751 = vmatmul.bf16.gmra.mxu0 %v499
        %v752 = vpop.f32.mrf.mxu0
        %v753 = vadd.f32 %v724, %v752
        %v754 = vpop.f32.mrf.mxu0
        %v755 = vadd.f32 %v726, %v754
        %756 = vmatmul.bf16.gmra.mxu0 %v502
        %v757 = vpop.f32.mrf.mxu0
        %v758 = vadd.f32 %v729, %v757
        %v759 = vpop.f32.mrf.mxu0
        %v760 = vadd.f32 %v731, %v759
        %761 = vmatmul.bf16.gmra.mxu0 %v505
        %v762 = vpop.f32.mrf.mxu0
        %v763 = vadd.f32 %v734, %v762
        %v764 = vpop.f32.mrf.mxu0
        %v765 = vadd.f32 %v736, %v764
        %766 = vdwg.mxu0
        %767 = vmatpush.bf16.msra.mxu0 %v382
        %768 = vmatpush.bf16.msra.mxu0 %v374
        %769 = vmatpush.bf16.msra.mxu0 %v366
        %770 = vmatpush.bf16.msra.mxu0 %v358
        %771 = vmatpush.bf16.msra.mxu0 %v350
        %772 = vmatpush.bf16.msra.mxu0 %v342
        %773 = vmatpush.bf16.msra.mxu0 %v334
        %774 = vmatpush.bf16.msra.mxu0 %v326
        %775 = vmatmul.bf16.gmra.mxu0 %v482
        %v776 = vpop.f32.mrf.mxu0
        %v777 = vadd.f32 %v421, %v776
        %v778 = vpop.f32.mrf.mxu0
        %v779 = vadd.f32 %v426, %v778
        %780 = vmatmul.bf16.gmra.mxu0 %v484
        %v781 = vpop.f32.mrf.mxu0
        %v782 = vadd.f32 %v431, %v781
        %v783 = vpop.f32.mrf.mxu0
        %v784 = vadd.f32 %v436, %v783
        %785 = vmatmul.bf16.gmra.mxu0 %v486
        %v786 = vpop.f32.mrf.mxu0
        %v787 = vadd.f32 %v441, %v786
        %v788 = vpop.f32.mrf.mxu0
        %v789 = vadd.f32 %v446, %v788
        %790 = vmatmul.bf16.gmra.mxu0 %v488
        %v791 = vpop.f32.mrf.mxu0
        %v792 = vadd.f32 %v451, %v791
        %v793 = vpop.f32.mrf.mxu0
        %v794 = vadd.f32 %v456, %v793
        %795 = vdwg.mxu0
        %796 = vmatpush.bf16.msra.mxu0 0
        %797 = vmatpush.bf16.msra.mxu0 0
        %798 = vmatpush.bf16.msra.mxu0 0
        %799 = vmatpush.bf16.msra.mxu0 0
        %800 = vmatpush.bf16.msra.mxu0 0
        %801 = vmatpush.bf16.msra.mxu0 0
        %802 = vmatpush.bf16.msra.mxu0 %v524
        %803 = vmatpush.bf16.msra.mxu0 %v390
        %804 = vmatmul.bf16.gmra.mxu0 %v496
        %v805 = vpop.f32.mrf.mxu0
        %v806 = vadd.f32 %v777, %v805
        %v807 = vpop.f32.mrf.mxu0
        %v808 = vadd.f32 %v779, %v807
        %809 = vmatmul.bf16.gmra.mxu0 %v499
        %v810 = vpop.f32.mrf.mxu0
        %v811 = vadd.f32 %v782, %v810
        %v812 = vpop.f32.mrf.mxu0
        %v813 = vadd.f32 %v784, %v812
        %814 = vmatmul.bf16.gmra.mxu0 %v502
        %v815 = vpop.f32.mrf.mxu0
        %v816 = vadd.f32 %v787, %v815
        %v817 = vpop.f32.mrf.mxu0
        %v818 = vadd.f32 %v789, %v817
        %819 = vmatmul.bf16.gmra.mxu0 %v505
        %v820 = vpop.f32.mrf.mxu0
        %v821 = vadd.f32 %v792, %v820
        %v822 = vpop.f32.mrf.mxu0
        %v823 = vadd.f32 %v794, %v822
        %824 = vdwg.mxu0
        %825 = vmatpush.bf16.msra.mxu0 %v383
        %826 = vmatpush.bf16.msra.mxu0 %v375
        %827 = vmatpush.bf16.msra.mxu0 %v367
        %828 = vmatpush.bf16.msra.mxu0 %v359
        %829 = vmatpush.bf16.msra.mxu0 %v351
        %830 = vmatpush.bf16.msra.mxu0 %v343
        %831 = vmatpush.bf16.msra.mxu0 %v335
        %832 = vmatpush.bf16.msra.mxu0 %v327
        %833 = vmatmul.bf16.gmra.mxu0 %v482
        %v834 = vpop.f32.mrf.mxu0
        %v835 = vadd.f32 %v421, %v834
        %v836 = vpop.f32.mrf.mxu0
        %v837 = vadd.f32 %v426, %v836
        %838 = vmatmul.bf16.gmra.mxu0 %v484
        %v839 = vpop.f32.mrf.mxu0
        %v840 = vadd.f32 %v431, %v839
        %v841 = vpop.f32.mrf.mxu0
        %v842 = vadd.f32 %v436, %v841
        %843 = vmatmul.bf16.gmra.mxu0 %v486
        %v844 = vpop.f32.mrf.mxu0
        %v845 = vadd.f32 %v441, %v844
        %v846 = vpop.f32.mrf.mxu0
        %v847 = vadd.f32 %v446, %v846
        %848 = vmatmul.bf16.gmra.mxu0 %v488
        %v849 = vpop.f32.mrf.mxu0
        %v850 = vadd.f32 %v451, %v849
        %v851 = vpop.f32.mrf.mxu0
        %v852 = vadd.f32 %v456, %v851
        %853 = vdwg.mxu0
        %854 = vmatpush.bf16.msra.mxu0 0
        %855 = vmatpush.bf16.msra.mxu0 0
        %856 = vmatpush.bf16.msra.mxu0 0
        %857 = vmatpush.bf16.msra.mxu0 0
        %858 = vmatpush.bf16.msra.mxu0 0
        %859 = vmatpush.bf16.msra.mxu0 0
        %860 = vmatpush.bf16.msra.mxu0 %v527
        %861 = vmatpush.bf16.msra.mxu0 %v391
        %862 = vmatmul.bf16.gmra.mxu0 %v496
        %v863 = vpop.f32.mrf.mxu0
        %v864 = vadd.f32 %v835, %v863
        %v865 = vpop.f32.mrf.mxu0
        %v866 = vadd.f32 %v837, %v865
        %867 = vmatmul.bf16.gmra.mxu0 %v499
        %v868 = vpop.f32.mrf.mxu0
        %v869 = vadd.f32 %v840, %v868
        %v870 = vpop.f32.mrf.mxu0
        %v871 = vadd.f32 %v842, %v870
        %872 = vmatmul.bf16.gmra.mxu0 %v502
        %v873 = vpop.f32.mrf.mxu0
        %v874 = vadd.f32 %v845, %v873
        %v875 = vpop.f32.mrf.mxu0
        %v876 = vadd.f32 %v847, %v875
        %877 = vmatmul.bf16.gmra.mxu0 %v505
        %v878 = vpop.f32.mrf.mxu0
        %v879 = vadd.f32 %v850, %v878
        %v880 = vpop.f32.mrf.mxu0
        %v881 = vadd.f32 %v852, %v880
        %882 = vdwg.mxu0
        %883 = vmatpush.bf16.msra.mxu0 %v384
        %884 = vmatpush.bf16.msra.mxu0 %v376
        %885 = vmatpush.bf16.msra.mxu0 %v368
        %886 = vmatpush.bf16.msra.mxu0 %v360
        %887 = vmatpush.bf16.msra.mxu0 %v352
        %888 = vmatpush.bf16.msra.mxu0 %v344
        %889 = vmatpush.bf16.msra.mxu0 %v336
        %890 = vmatpush.bf16.msra.mxu0 %v328
        %891 = vmatmul.bf16.gmra.mxu0 %v482
        %v892 = vpop.f32.mrf.mxu0
        %v893 = vadd.f32 %v421, %v892
        %v894 = vpop.f32.mrf.mxu0
        %v895 = vadd.f32 %v426, %v894
        %896 = vmatmul.bf16.gmra.mxu0 %v484
        %v897 = vpop.f32.mrf.mxu0
        %v898 = vadd.f32 %v431, %v897
        %v899 = vpop.f32.mrf.mxu0
        %v900 = vadd.f32 %v436, %v899
        %901 = vmatmul.bf16.gmra.mxu0 %v486
        %v902 = vpop.f32.mrf.mxu0
        %v903 = vadd.f32 %v441, %v902
        %v904 = vpop.f32.mrf.mxu0
        %v905 = vadd.f32 %v446, %v904
        %906 = vmatmul.bf16.gmra.mxu0 %v488
        %v907 = vpop.f32.mrf.mxu0
        %v908 = vadd.f32 %v451, %v907
        %v909 = vpop.f32.mrf.mxu0
        %v910 = vadd.f32 %v456, %v909
        %911 = vdwg.mxu0
        %912 = vmatpush.bf16.msra.mxu0 0
        %913 = vmatpush.bf16.msra.mxu0 0
        %914 = vmatpush.bf16.msra.mxu0 0
        %915 = vmatpush.bf16.msra.mxu0 0
        %916 = vmatpush.bf16.msra.mxu0 0
        %917 = vmatpush.bf16.msra.mxu0 0
        %918 = vmatpush.bf16.msra.mxu0 %v530
        %919 = vmatpush.bf16.msra.mxu0 %v392
        %920 = vmatmul.bf16.gmra.mxu0 %v496
        %v921 = vpop.f32.mrf.mxu0
        %v922 = vadd.f32 %v893, %v921
        %v923 = vpop.f32.mrf.mxu0
        %v924 = vadd.f32 %v895, %v923
        %925 = vmatmul.bf16.gmra.mxu0 %v499
        %v926 = vpop.f32.mrf.mxu0
        %v927 = vadd.f32 %v898, %v926
        %v928 = vpop.f32.mrf.mxu0
        %v929 = vadd.f32 %v900, %v928
        %930 = vmatmul.bf16.gmra.mxu0 %v502
        %v931 = vpop.f32.mrf.mxu0
        %v932 = vadd.f32 %v903, %v931
        %v933 = vpop.f32.mrf.mxu0
        %v934 = vadd.f32 %v905, %v933
        %935 = vmatmul.bf16.gmra.mxu0 %v505
        %v936 = vpop.f32.mrf.mxu0
        %v937 = vadd.f32 %v908, %v936
        %v938 = vpop.f32.mrf.mxu0
        %v939 = vadd.f32 %v910, %v938
        %940 = vdwg.mxu0
        %941 = vmatpush.bf16.msra.mxu0 %v385
        %942 = vmatpush.bf16.msra.mxu0 %v377
        %943 = vmatpush.bf16.msra.mxu0 %v369
        %944 = vmatpush.bf16.msra.mxu0 %v361
        %945 = vmatpush.bf16.msra.mxu0 %v353
        %946 = vmatpush.bf16.msra.mxu0 %v345
        %947 = vmatpush.bf16.msra.mxu0 %v337
        %948 = vmatpush.bf16.msra.mxu0 %v329
        %949 = vmatmul.bf16.gmra.mxu0 %v482
        %v950 = vpop.f32.mrf.mxu0
        %v951 = vadd.f32 %v421, %v950
        %v952 = vpop.f32.mrf.mxu0
        %v953 = vadd.f32 %v426, %v952
        %954 = vmatmul.bf16.gmra.mxu0 %v484
        %v955 = vpop.f32.mrf.mxu0
        %v956 = vadd.f32 %v431, %v955
        %v957 = vpop.f32.mrf.mxu0
        %v958 = vadd.f32 %v436, %v957
        %959 = vmatmul.bf16.gmra.mxu0 %v486
        %v960 = vpop.f32.mrf.mxu0
        %v961 = vadd.f32 %v441, %v960
        %v962 = vpop.f32.mrf.mxu0
        %v963 = vadd.f32 %v446, %v962
        %964 = vmatmul.bf16.gmra.mxu0 %v488
        %v965 = vpop.f32.mrf.mxu0
        %v966 = vadd.f32 %v451, %v965
        %v967 = vpop.f32.mrf.mxu0
        %v968 = vadd.f32 %v456, %v967
        %969 = vdwg.mxu0
        %970 = vmatpush.bf16.msra.mxu0 0
        %971 = vmatpush.bf16.msra.mxu0 0
        %972 = vmatpush.bf16.msra.mxu0 0
        %973 = vmatpush.bf16.msra.mxu0 0
        %974 = vmatpush.bf16.msra.mxu0 0
        %975 = vmatpush.bf16.msra.mxu0 0
        %976 = vmatpush.bf16.msra.mxu0 %v533
        %977 = vmatpush.bf16.msra.mxu0 %v393
        %978 = vmatmul.bf16.gmra.mxu0 %v496
        %v979 = vpop.f32.mrf.mxu0
        %v980 = vadd.f32 %v951, %v979
        %v981 = vpop.f32.mrf.mxu0
        %v982 = vadd.f32 %v953, %v981
        %983 = vmatmul.bf16.gmra.mxu0 %v499
        %v984 = vpop.f32.mrf.mxu0
        %v985 = vadd.f32 %v956, %v984
        %v986 = vpop.f32.mrf.mxu0
        %v987 = vadd.f32 %v958, %v986
        %988 = vmatmul.bf16.gmra.mxu0 %v502
        %v989 = vpop.f32.mrf.mxu0
        %v990 = vadd.f32 %v961, %v989
        %v991 = vpop.f32.mrf.mxu0
        %v992 = vadd.f32 %v963, %v991
        %993 = vmatmul.bf16.gmra.mxu0 %v505
        %v994 = vpop.f32.mrf.mxu0
        %v995 = vadd.f32 %v966, %v994
        %v996 = vpop.f32.mrf.mxu0
        %v997 = vadd.f32 %v968, %v996
        %998 = vdwg.mxu0
        %v999 = vmax.f32 %v574, 0.0
        %v1000 = vmax.f32 %v632, 0.0
        %v1001 = vmax.f32 %v690, 0.0
        %v1002 = vmax.f32 %v748, 0.0
        %v1003 = vmax.f32 %v806, 0.0
        %v1004 = vmax.f32 %v864, 0.0
        %v1005 = vmax.f32 %v922, 0.0
        %v1006 = vmax.f32 %v980, 0.0
        %v1007 = vmax.f32 %v576, 0.0
        %v1008 = vmax.f32 %v634, 0.0
        %v1009 = vmax.f32 %v692, 0.0
        %v1010 = vmax.f32 %v750, 0.0
        %v1011 = vmax.f32 %v808, 0.0
        %v1012 = vmax.f32 %v866, 0.0
        %v1013 = vmax.f32 %v924, 0.0
        %v1014 = vmax.f32 %v982, 0.0
        %v1015 = vmax.f32 %v579, 0.0
        %v1016 = vmax.f32 %v637, 0.0
        %v1017 = vmax.f32 %v695, 0.0
        %v1018 = vmax.f32 %v753, 0.0
        %v1019 = vmax.f32 %v811, 0.0
        %v1020 = vmax.f32 %v869, 0.0
        %v1021 = vmax.f32 %v927, 0.0
        %v1022 = vmax.f32 %v985, 0.0
        %v1023 = vmax.f32 %v581, 0.0
        %v1024 = vmax.f32 %v639, 0.0
        %v1025 = vmax.f32 %v697, 0.0
        %v1026 = vmax.f32 %v755, 0.0
        %v1027 = vmax.f32 %v813, 0.0
        %v1028 = vmax.f32 %v871, 0.0
        %v1029 = vmax.f32 %v929, 0.0
        %v1030 = vmax.f32 %v987, 0.0
        %v1031 = vmax.f32 %v584, 0.0
        %v1032 = vmax.f32 %v642, 0.0
        %v1033 = vmax.f32 %v700, 0.0
        %v1034 = vmax.f32 %v758, 0.0
        %v1035 = vmax.f32 %v816, 0.0
        %v1036 = vmax.f32 %v874, 0.0
        %v1037 = vmax.f32 %v932, 0.0
        %v1038 = vmax.f32 %v990, 0.0
        %v1039 = vmax.f32 %v586, 0.0
        %v1040 = vmax.f32 %v644, 0.0
        %v1041 = vmax.f32 %v702, 0.0
        %v1042 = vmax.f32 %v760, 0.0
        %v1043 = vmax.f32 %v818, 0.0
        %v1044 = vmax.f32 %v876, 0.0
        %v1045 = vmax.f32 %v934, 0.0
        %v1046 = vmax.f32 %v992, 0.0
        %v1047 = vmax.f32 %v589, 0.0
        %v1048 = vmax.f32 %v647, 0.0
        %v1049 = vmax.f32 %v705, 0.0
        %v1050 = vmax.f32 %v763, 0.0
        %v1051 = vmax.f32 %v821, 0.0
        %v1052 = vmax.f32 %v879, 0.0
        %v1053 = vmax.f32 %v937, 0.0
        %v1054 = vmax.f32 %v995, 0.0
        %v1055 = vmax.f32 %v591, 0.0
        %v1056 = vmax.f32 %v649, 0.0
        %v1057 = vmax.f32 %v707, 0.0
        %v1058 = vmax.f32 %v765, 0.0
        %v1059 = vmax.f32 %v823, 0.0
        %v1060 = vmax.f32 %v881, 0.0
        %v1061 = vmax.f32 %v939, 0.0
        %v1062 = vmax.f32 %v997, 0.0
        %v1063 = vpack.c.bf16 %v1000, %v999
        %v1064 = vpack.c.bf16 %v1002, %v1001
        %v1065 = vpack.c.bf16 %v1004, %v1003
        %v1066 = vpack.c.bf16 %v1006, %v1005
        %v1067 = vpack.c.bf16 %v1008, %v1007
        %v1068 = vpack.c.bf16 %v1010, %v1009
        %v1069 = vpack.c.bf16 %v1012, %v1011
        %v1070 = vpack.c.bf16 %v1014, %v1013
        %v1071 = vpack.c.bf16 %v1016, %v1015
        %v1072 = vpack.c.bf16 %v1018, %v1017
        %v1073 = vpack.c.bf16 %v1020, %v1019
        %v1074 = vpack.c.bf16 %v1022, %v1021
        %v1075 = vpack.c.bf16 %v1024, %v1023
        %v1076 = vpack.c.bf16 %v1026, %v1025
        %v1077 = vpack.c.bf16 %v1028, %v1027
        %v1078 = vpack.c.bf16 %v1030, %v1029
        %v1079 = vpack.c.bf16 %v1032, %v1031
        %v1080 = vpack.c.bf16 %v1034, %v1033
        %v1081 = vpack.c.bf16 %v1036, %v1035
        %v1082 = vpack.c.bf16 %v1038, %v1037
        %v1083 = vpack.c.bf16 %v1040, %v1039
        %v1084 = vpack.c.bf16 %v1042, %v1041
        %v1085 = vpack.c.bf16 %v1044, %v1043
        %v1086 = vpack.c.bf16 %v1046, %v1045
        %v1087 = vpack.c.bf16 %v1048, %v1047
        %v1088 = vpack.c.bf16 %v1050, %v1049
        %v1089 = vpack.c.bf16 %v1052, %v1051
        %v1090 = vpack.c.bf16 %v1054, %v1053
        %v1091 = vpack.c.bf16 %v1056, %v1055
        %v1092 = vpack.c.bf16 %v1058, %v1057
        %v1093 = vpack.c.bf16 %v1060, %v1059
        %v1094 = vpack.c.bf16 %v1062, %v1061
        %1095 = vst [vmem:[%s163] sm:$0xff] %v1063
        %1096 = vst [vmem:[%s163 + $0x8] sm:$0xff] %v1064
        %1097 = vst [vmem:[%s163 + $0x10] sm:$0xff] %v1065
        %1098 = vst [vmem:[%s163 + $0x18] sm:$0xff] %v1066
        %1099 = vst [vmem:[%s163 + $0x20] sm:$0xff] %v1067
        %1100 = vst [vmem:[%s163 + $0x28] sm:$0xff] %v1068
        %1101 = vst [vmem:[%s163 + $0x30] sm:$0xff] %v1069
        %1102 = vst [vmem:[%s163 + $0x38] sm:$0xff] %v1070
        %1103 = vst [vmem:[%s163 + $0x40] sm:$0xff] %v1071
        %1104 = vst [vmem:[%s163 + $0x48] sm:$0xff] %v1072
        %1105 = vst [vmem:[%s163 + $0x50] sm:$0xff] %v1073
        %1106 = vst [vmem:[%s163 + $0x58] sm:$0xff] %v1074
        %1107 = vst [vmem:[%s163 + $0x60] sm:$0xff] %v1075
        %1108 = vst [vmem:[%s163 + $0x68] sm:$0xff] %v1076
        %1109 = vst [vmem:[%s163 + $0x70] sm:$0xff] %v1077
        %1110 = vst [vmem:[%s163 + $0x78] sm:$0xff] %v1078
        %1111 = vst [vmem:[%s163 + $0x80] sm:$0xff] %v1079
        %1112 = vst [vmem:[%s163 + $0x88] sm:$0xff] %v1080
        %1113 = vst [vmem:[%s163 + $0x90] sm:$0xff] %v1081
        %1114 = vst [vmem:[%s163 + $0x98] sm:$0xff] %v1082
        %1115 = vst [vmem:[%s163 + $0xa0] sm:$0xff] %v1083
        %1116 = vst [vmem:[%s163 + $0xa8] sm:$0xff] %v1084
        %1117 = vst [vmem:[%s163 + $0xb0] sm:$0xff] %v1085
        %1118 = vst [vmem:[%s163 + $0xb8] sm:$0xff] %v1086
        %1119 = vst [vmem:[%s163 + $0xc0] sm:$0xff] %v1087
        %1120 = vst [vmem:[%s163 + $0xc8] sm:$0xff] %v1088
        %1121 = vst [vmem:[%s163 + $0xd0] sm:$0xff] %v1089
        %1122 = vst [vmem:[%s163 + $0xd8] sm:$0xff] %v1090
        %1123 = vst [vmem:[%s163 + $0xe0] sm:$0xff] %v1091
        %1124 = vst [vmem:[%s163 + $0xe8] sm:$0xff] %v1092
        %1125 = vst [vmem:[%s163 + $0xf0] sm:$0xff] %v1093
        %1126 = vst [vmem:[%s163 + $0xf8] sm:$0xff] %v1094
        %s1127 = sand.u32 %s93, 1
        %s1128 = scalar_lea.sflag [#allocation3], %s1127
        %s1129 = sand.u32 %s93, 1
        %s1130 = smul.addr %s1129, 256
        %s1131 = scalar_lea.vmem [#allocation2], %s1130
        // Predicated region
        $region33: #{tpu_custom_call.1} parent=31 // pred_check
          %p1132 = pneg %p103
        $region34: #{tpu_custom_call.1} parent=31 // pred_check_branch
          %1134 = sbr.rel (%p1132) target = $region36
        $region35: #{tpu_custom_call.1} parent=31 // pred_region
          %1136 = vsyncadd %s1128, 0
          %s1137 = smul.addr %s17, 64
          %s1138 = smul.addr %s1137, 4
          %s1139 = scalar_lea.hbm %s3, %s1138
          %s1140 = sshll.u32 %s1131, 4
          %s1141 = int_to_ptr.vmem [resolvable:$true] %s1140
          %s1142 = sshll.u32 %s1139, 4
          %s1143 = int_to_ptr.hbm [resolvable:$true] %s1142
          %1148 = dma.vmem_to_hbm [thread:$0]  %s1141, 4096, %s1143, %s1128, 512, 512, 32
        $region36: #{tpu_custom_call.1} parent=31 // pred_fallthru
          _
      $region32: #{tpu_custom_call.1} parent=5 // pred_fallthru
        _
      %p1149 = scmp.le.s32.totalorder 2, %s12
      // Predicated region
      $region37: #{tpu_custom_call.1} parent=5 // pred_check
        %p1150 = pneg %p1149
      $region38: #{tpu_custom_call.1} parent=5 // pred_check_branch
        %1152 = sbr.rel (%p1150) target = $region40
      $region39: #{tpu_custom_call.1} parent=5 // pred_region
        %s1153 = ssub.s32 %s12, 2
        // Predicated region
        $region41: #{tpu_custom_call.1} parent=39 // pred_check
          %p1154 = pneg %p109
        $region42: #{tpu_custom_call.1} parent=39 // pred_check_branch
          %1156 = sbr.rel (%p1154) target = $region44
        $region43: #{tpu_custom_call.1} parent=39 // pred_region
          %s1157 = sand.u32 %s94, 1
          %s1158 = scalar_lea.sflag [#allocation3], %s1157
          %s1159 = sand.u32 %s94, 1
          %s1160 = smul.addr %s1159, 256
          %s1161 = scalar_lea.vmem [#allocation2], %s1160
          %1163 = dma.done %s1158, 4096
        $region44: #{tpu_custom_call.1} parent=39 // pred_fallthru
          _
      $region40: #{tpu_custom_call.1} parent=5 // pred_fallthru
        _
    $region6: #{tpu_custom_call.1} parent=1 // loop_footer
      %s16 = sadd.s32 1, %s12
    $region7: #{tpu_custom_call.1} parent=1 // loop_footer_branch
      %11 = sbr.rel target = $region3
    $region8: #{tpu_custom_call.1} parent=1 // loop_exit
      _
    %1164 = vsyncpa [#allocation3], 1
    %s1165 = scalar_lea.sflag [#allocation3], 1
    %1166 = vsyncpa %s1165, 1

</llo_original>
